<compile_context>
chip_gen: v6e
topology: v6e:2x2x1
jax: 0.10.0
libtpu: 0.0.40
codegen_flags: <defaults>
</compile_context>

<pallas_src>
import functools

import jax
import jax.numpy as jnp
from jax.experimental import pallas as pl
from jax.experimental.pallas import tpu as pltpu


def _round_up(x: int, m: int) -> int:
    return ((x + m - 1) // m) * m


def _has_bf16_vpu() -> bool:
    """True on TPU generations with a bf16 vector ALU (v6e, v7x); False on v5e and older."""
    try:
        kind = jax.devices()[0].device_kind.lower()
    except Exception:
        return False
    return ("v6" in kind) or ("v7" in kind)


def _bias_relu(h_f32, b_ref, bf16_epilogue: bool):
    """relu(h + b), returned as bf16 ready for the next MXU matmul."""
    if bf16_epilogue:
        # v6e/v7x: bf16 VALU -> halve epilogue vector work on the dependent activation chain.
        hb = h_f32.astype(jnp.bfloat16) + b_ref[...].astype(jnp.bfloat16)
        return jnp.maximum(hb, 0.0)
    # v5e: no bf16 VALU; bias-add + relu in f32, single cast afterwards.
    return jnp.maximum(h_f32 + b_ref[...], 0.0).astype(jnp.bfloat16)


def mlp_kernel(x_ref, w1_ref, b1_ref, w2_ref, b2_ref, w3_ref, b3_ref,
               w4_ref, b4_ref, o_ref, *, bf16_epilogue: bool):
    # Cast x to bf16 in-kernel (no extra HBM pad/cast pass in the wrapper).
    x = x_ref[...].astype(jnp.bfloat16)
    # Hidden layers 1..3: relu(x @ W + b); bf16 MXU matmuls with f32 accumulation.
    h = jnp.dot(x, w1_ref[...], preferred_element_type=jnp.float32)
    h = _bias_relu(h, b1_ref, bf16_epilogue)      # (dropout1: identity in eval mode)
    h = jnp.dot(h, w2_ref[...], preferred_element_type=jnp.float32)
    h = _bias_relu(h, b2_ref, bf16_epilogue)      # (dropout2: identity in eval mode)
    h = jnp.dot(h, w3_ref[...], preferred_element_type=jnp.float32)
    h = _bias_relu(h, b3_ref, bf16_epilogue)
    # Output layer at its true (un-padded) width -> 16x smaller writeback than a 128-lane
    # padded slab; bias-add in f32 and f32 store, matching the PyTorch module's output.
    out = jnp.dot(h, w4_ref[...], preferred_element_type=jnp.float32)
    o_ref[...] = (out + b4_ref[...]).astype(o_ref.dtype)


def _choose_tm(batch: int, block_m: int) -> int:
    """Batch-tile rows.  Small batches: one full-batch block (full-dim BlockSpec, no padded
    rows).  Large batches: multiple-of-128 tile capped at block_m, sized so the grid has
    >=2 steps (so v7x can shard the parallel axis across both TensorCores)."""
    if batch <= 256:
        return batch
    return min(block_m, _round_up(pl.cdiv(batch, 2), 128))


def three_hidden_layer_forward(x, params, *, block_m: int = 1024, bf16_epilogue=None):
    """x: (B, input_size) f32.  params: bf16 weights in (in, out) layout (hidden widths
    zero-padded to 128 lanes; input/output widths true) + f32 biases."""
    if bf16_epilogue is None:
        bf16_epilogue = _has_bf16_vpu()
    block_m = max(128, _round_up(block_m, 128))   # keep tile rows sublane/MXU aligned

    B, in_size = x.shape
    assert params["w1"].shape[0] == in_size, "input feature size mismatch"
    out_size = params["w4"].shape[1]

    tm = _choose_tm(B, block_m)
    grid = (pl.cdiv(B, tm),)

    w1, b1 = params["w1"], params["b1"]
    w2, b2 = params["w2"], params["b2"]
    w3, b3 = params["w3"], params["b3"]
    w4, b4 = params["w4"], params["b4"]

    def tiled(feat):                  # batch-tiled, double-buffered along the grid
        return pl.BlockSpec((tm, feat), lambda i: (i, 0))

    def resident(arr):                # constant index_map -> stays resident in VMEM
        return pl.BlockSpec(arr.shape, lambda i: (0, 0))

    n1p, n2p, n3p = w1.shape[1], w2.shape[1], w3.shape[1]
    flops = 2 * B * (in_size * n1p + n1p * n2p + n2p * n3p + n3p * out_size)
    bytes_accessed = (
        x.size * x.dtype.itemsize
        + sum(a.size * a.dtype.itemsize for a in (w1, b1, w2, b2, w3, b3, w4, b4))
        + B * out_size * 4)

    kernel = functools.partial(mlp_kernel, bf16_epilogue=bf16_epilogue)
    return pl.pallas_call(
        kernel,
        out_shape=jax.ShapeDtypeStruct((B, out_size), jnp.float32),
        grid_spec=pltpu.PrefetchScalarGridSpec(
            num_scalar_prefetch=0,
            grid=grid,
            in_specs=[
                tiled(in_size),                    # x tile (f32, cast to bf16 in-kernel)
                resident(w1), resident(b1),
                resident(w2), resident(b2),
                resident(w3), resident(b3),
                resident(w4), resident(b4),
            ],
            out_specs=tiled(out_size),
        ),
        compiler_params=pltpu.CompilerParams(
            dimension_semantics=("parallel",),     # shard batch tiles across TCs (v7x)
        ),
        cost_estimate=pl.CostEstimate(
            flops=flops, transcendentals=0, bytes_accessed=bytes_accessed),
    )(x, w1, b1, w2, b2, w3, b3, w4, b4)


def init_params(key, input_size, output_size, n1, n2, n3):
    """Kaiming-normal (relu) weights like nn.init.kaiming_normal_; biases use the nn.Linear
    default U(-1/sqrt(fan_in), 1/sqrt(fan_in)).  Weights are stored transposed to (in, out)
    and cast to bf16.  Hidden widths are zero-padded to multiples of 128 (zero rows/cols do
    not change the math); the input width and final output width keep their true sizes so x
    streams unpadded and the output store is narrow."""
    ks = jax.random.split(key, 8)

    def layer(kw, kb, fan_in, fan_out, pad_in, pad_out):
        std = (2.0 / fan_in) ** 0.5
        # PyTorch weight shape is (out, in); sample that, then transpose to (in, out).
        w = jax.random.normal(kw, (fan_out, fan_in), jnp.float32) * std
        wt = jnp.pad(w.T, ((0, pad_in - fan_in), (0, pad_out - fan_out)))
        bound = 1.0 / (fan_in ** 0.5)
        b = jax.random.uniform(kb, (1, fan_out), jnp.float32, -bound, bound)
        b = jnp.pad(b, ((0, 0), (0, pad_out - fan_out)))
        return wt.astype(jnp.bfloat16), b          # biases stay f32

    n1p, n2p, n3p = (_round_up(n, 128) for n in (n1, n2, n3))
    w1, b1 = layer(ks[0], ks[1], input_size, n1, input_size, n1p)
    w2, b2 = layer(ks[2], ks[3], n1, n2, n1p, n2p)
    w3, b3 = layer(ks[4], ks[5], n2, n3, n2p, n3p)
    w4, b4 = layer(ks[6], ks[7], n3, output_size, n3p, output_size)
    return {"w1": w1, "b1": b1, "w2": w2, "b2": b2,
            "w3": w3, "b3": b3, "w4": w4, "b4": b4}


def reference_forward(x, p, *, bf16_epilogue):
    """Pure-JAX reference replicating the kernel's bf16-matmul / f32-accumulate math
    (including the epilogue precision), so the tolerance only covers reduction order."""
    def act(h, b):
        if bf16_epilogue:
            return jnp.maximum(h.astype(jnp.bfloat16) + b.astype(jnp.bfloat16), 0.0)
        return jnp.maximum(h + b, 0.0).astype(jnp.bfloat16)

    h = jnp.dot(x.astype(jnp.bfloat16), p["w1"], preferred_element_type=jnp.float32)
    h = act(h, p["b1"])
    h = jnp.dot(h, p["w2"], preferred_element_type=jnp.float32)
    h = act(h, p["b2"])
    h = jnp.dot(h, p["w3"], preferred_element_type=jnp.float32)
    h = act(h, p["b3"])
    return jnp.dot(h, p["w4"], preferred_element_type=jnp.float32) + p["b4"]


if __name__ == "__main__":
    # Small shapes consistent with the module's Linear stack.
    batch = 8
    input_size, output_size = 64, 8
    n1, n2, n3 = 128, 64, 32

    key = jax.random.PRNGKey(0)
    kx, kp = jax.random.split(key)
    x = jax.random.normal(kx, (batch, input_size), jnp.float32)
    params = init_params(kp, input_size, output_size, n1, n2, n3)

    out = three_hidden_layer_forward(x, params)
    out = jax.block_until_ready(out)

    ref = reference_forward(x, params, bf16_epilogue=_has_bf16_vpu())
    assert out.shape == (batch, output_size)
    # Tolerance rationale: reference uses the same bf16 weights/activations as the kernel
    # (this validates the kernel math, not parity with the f32 PyTorch module, which would
    # differ by the bf16 quantization ~1e-2 relative).
    assert jnp.allclose(out, ref, atol=1e-2, rtol=1e-2), (
        float(jnp.max(jnp.abs(out - ref))))

    print("KERNEL_OK")
</pallas_src>

<mosaic_0001>
module attributes {stable_mosaic.version = 11 : i64} {
  func.func @mlp_kernel(%arg0: i32, %arg1: memref<8x64xf32, #tpu.memory_space<vmem>>, %arg2: memref<64x128xbf16, #tpu.memory_space<vmem>>, %arg3: memref<1x128xf32, #tpu.memory_space<vmem>>, %arg4: memref<128x128xbf16, #tpu.memory_space<vmem>>, %arg5: memref<1x128xf32, #tpu.memory_space<vmem>>, %arg6: memref<128x128xbf16, #tpu.memory_space<vmem>>, %arg7: memref<1x128xf32, #tpu.memory_space<vmem>>, %arg8: memref<128x8xbf16, #tpu.memory_space<vmem>>, %arg9: memref<1x8xf32, #tpu.memory_space<vmem>>, %arg10: memref<8x8xf32, #tpu.memory_space<vmem>>) attributes {dimension_semantics = [#tpu.dimension_semantics<parallel>], iteration_bounds = array<i64: 1>, scalar_prefetch = 0 : i64, scratch_operands = 0 : i64, tpu.core_type = #tpu.core_type<tc>, window_params = [{transform_indices = @transform_0, window_bounds = array<i64: 8, 64>}, {pipeline_mode = #tpu.pipeline_mode<synchronous>, transform_indices = @transform_1, window_bounds = array<i64: 64, 128>}, {pipeline_mode = #tpu.pipeline_mode<synchronous>, transform_indices = @transform_2, window_bounds = array<i64: 1, 128>}, {pipeline_mode = #tpu.pipeline_mode<synchronous>, transform_indices = @transform_3, window_bounds = array<i64: 128, 128>}, {pipeline_mode = #tpu.pipeline_mode<synchronous>, transform_indices = @transform_4, window_bounds = array<i64: 1, 128>}, {pipeline_mode = #tpu.pipeline_mode<synchronous>, transform_indices = @transform_5, window_bounds = array<i64: 128, 128>}, {pipeline_mode = #tpu.pipeline_mode<synchronous>, transform_indices = @transform_6, window_bounds = array<i64: 1, 128>}, {pipeline_mode = #tpu.pipeline_mode<synchronous>, transform_indices = @transform_7, window_bounds = array<i64: 128, 8>}, {pipeline_mode = #tpu.pipeline_mode<synchronous>, transform_indices = @transform_8, window_bounds = array<i64: 1, 8>}, {transform_indices = @transform_9, window_bounds = array<i64: 8, 8>}]} {
    %c0 = arith.constant 0 : index
    %c0_0 = arith.constant 0 : index
    %0 = vector.load %arg1[%c0, %c0_0] : memref<8x64xf32, #tpu.memory_space<vmem>>, vector<8x64xf32>
    %1 = arith.truncf %0 : vector<8x64xf32> to vector<8x64xbf16>
    %c0_1 = arith.constant 0 : index
    %c0_2 = arith.constant 0 : index
    %2 = vector.load %arg2[%c0_1, %c0_2] : memref<64x128xbf16, #tpu.memory_space<vmem>>, vector<64x128xbf16>
    %cst = arith.constant dense<0.000000e+00> : vector<8x128xf32>
    %3 = tpu.matmul %1, %2, %cst {dimension_numbers = #tpu.dot_dimension_numbers<[1], [0], [0], [1], [0, 0, 1, 1], [], []>} : vector<8x64xbf16>, vector<64x128xbf16>, vector<8x128xf32> -> vector<8x128xf32>
    %c0_3 = arith.constant 0 : index
    %c0_4 = arith.constant 0 : index
    %4 = vector.load %arg3[%c0_3, %c0_4] : memref<1x128xf32, #tpu.memory_space<vmem>>, vector<1x128xf32>
    %5 = vector.broadcast %4 : vector<1x128xf32> to vector<8x128xf32>
    %6 = arith.addf %3, %5 : vector<8x128xf32>
    %cst_5 = arith.constant 0.000000e+00 : f32
    %7 = vector.broadcast %cst_5 : f32 to vector<8x128xf32>
    %8 = arith.maximumf %6, %7 : vector<8x128xf32>
    %9 = arith.truncf %8 : vector<8x128xf32> to vector<8x128xbf16>
    %c0_6 = arith.constant 0 : index
    %c0_7 = arith.constant 0 : index
    %10 = vector.load %arg4[%c0_6, %c0_7] : memref<128x128xbf16, #tpu.memory_space<vmem>>, vector<128x128xbf16>
    %cst_8 = arith.constant dense<0.000000e+00> : vector<8x128xf32>
    %11 = tpu.matmul %9, %10, %cst_8 {dimension_numbers = #tpu.dot_dimension_numbers<[1], [0], [0], [1], [0, 0, 1, 1], [], []>} : vector<8x128xbf16>, vector<128x128xbf16>, vector<8x128xf32> -> vector<8x128xf32>
    %c0_9 = arith.constant 0 : index
    %c0_10 = arith.constant 0 : index
    %12 = vector.load %arg5[%c0_9, %c0_10] : memref<1x128xf32, #tpu.memory_space<vmem>>, vector<1x128xf32>
    %13 = vector.broadcast %12 : vector<1x128xf32> to vector<8x128xf32>
    %14 = arith.addf %11, %13 : vector<8x128xf32>
    %cst_11 = arith.constant 0.000000e+00 : f32
    %15 = vector.broadcast %cst_11 : f32 to vector<8x128xf32>
    %16 = arith.maximumf %14, %15 : vector<8x128xf32>
    %17 = arith.truncf %16 : vector<8x128xf32> to vector<8x128xbf16>
    %c0_12 = arith.constant 0 : index
    %c0_13 = arith.constant 0 : index
    %18 = vector.load %arg6[%c0_12, %c0_13] : memref<128x128xbf16, #tpu.memory_space<vmem>>, vector<128x128xbf16>
    %cst_14 = arith.constant dense<0.000000e+00> : vector<8x128xf32>
    %19 = tpu.matmul %17, %18, %cst_14 {dimension_numbers = #tpu.dot_dimension_numbers<[1], [0], [0], [1], [0, 0, 1, 1], [], []>} : vector<8x128xbf16>, vector<128x128xbf16>, vector<8x128xf32> -> vector<8x128xf32>
    %c0_15 = arith.constant 0 : index
    %c0_16 = arith.constant 0 : index
    %20 = vector.load %arg7[%c0_15, %c0_16] : memref<1x128xf32, #tpu.memory_space<vmem>>, vector<1x128xf32>
    %21 = vector.broadcast %20 : vector<1x128xf32> to vector<8x128xf32>
    %22 = arith.addf %19, %21 : vector<8x128xf32>
    %cst_17 = arith.constant 0.000000e+00 : f32
    %23 = vector.broadcast %cst_17 : f32 to vector<8x128xf32>
    %24 = arith.maximumf %22, %23 : vector<8x128xf32>
    %25 = arith.truncf %24 : vector<8x128xf32> to vector<8x128xbf16>
    %c0_18 = arith.constant 0 : index
    %c0_19 = arith.constant 0 : index
    %26 = vector.load %arg8[%c0_18, %c0_19] : memref<128x8xbf16, #tpu.memory_space<vmem>>, vector<128x8xbf16>
    %cst_20 = arith.constant dense<0.000000e+00> : vector<8x8xf32>
    %27 = tpu.matmul %25, %26, %cst_20 {dimension_numbers = #tpu.dot_dimension_numbers<[1], [0], [0], [1], [0, 0, 1, 1], [], []>} : vector<8x128xbf16>, vector<128x8xbf16>, vector<8x8xf32> -> vector<8x8xf32>
    %c0_21 = arith.constant 0 : index
    %c0_22 = arith.constant 0 : index
    %28 = vector.load %arg9[%c0_21, %c0_22] : memref<1x8xf32, #tpu.memory_space<vmem>>, vector<1x8xf32>
    %29 = vector.broadcast %28 : vector<1x8xf32> to vector<8x8xf32>
    %30 = arith.addf %27, %29 : vector<8x8xf32>
    %c0_23 = arith.constant 0 : index
    %c0_24 = arith.constant 0 : index
    %31 = vector.load %arg10[%c0_23, %c0_24] : memref<8x8xf32, #tpu.memory_space<vmem>>, vector<8x8xf32>
    tpu.vector_store %arg10[%c0_23, %c0_24], %30 {strides = array<i32>} : memref<8x8xf32, #tpu.memory_space<vmem>>, vector<8x8xf32>,
    return
  }
  func.func @transform_0(%arg0: i32) -> (i32, i32) {
    %c0_i32 = arith.constant 0 : i32
    %c0_i32_0 = arith.constant 0 : i32
    return %arg0, %c0_i32 : i32, i32
  }
  func.func @transform_1(%arg0: i32) -> (i32, i32) {
    %c0_i32 = arith.constant 0 : i32
    %c0_i32_0 = arith.constant 0 : i32
    %c0_i32_1 = arith.constant 0 : i32
    return %c0_i32, %c0_i32_0 : i32, i32
  }
  func.func @transform_2(%arg0: i32) -> (i32, i32) {
    %c0_i32 = arith.constant 0 : i32
    %c0_i32_0 = arith.constant 0 : i32
    %c0_i32_1 = arith.constant 0 : i32
    return %c0_i32, %c0_i32_0 : i32, i32
  }
  func.func @transform_3(%arg0: i32) -> (i32, i32) {
    %c0_i32 = arith.constant 0 : i32
    %c0_i32_0 = arith.constant 0 : i32
    %c0_i32_1 = arith.constant 0 : i32
    return %c0_i32, %c0_i32_0 : i32, i32
  }
  func.func @transform_4(%arg0: i32) -> (i32, i32) {
    %c0_i32 = arith.constant 0 : i32
    %c0_i32_0 = arith.constant 0 : i32
    %c0_i32_1 = arith.constant 0 : i32
    return %c0_i32, %c0_i32_0 : i32, i32
  }
  func.func @transform_5(%arg0: i32) -> (i32, i32) {
    %c0_i32 = arith.constant 0 : i32
    %c0_i32_0 = arith.constant 0 : i32
    %c0_i32_1 = arith.constant 0 : i32
    return %c0_i32, %c0_i32_0 : i32, i32
  }
  func.func @transform_6(%arg0: i32) -> (i32, i32) {
    %c0_i32 = arith.constant 0 : i32
    %c0_i32_0 = arith.constant 0 : i32
    %c0_i32_1 = arith.constant 0 : i32
    return %c0_i32, %c0_i32_0 : i32, i32
  }
  func.func @transform_7(%arg0: i32) -> (i32, i32) {
    %c0_i32 = arith.constant 0 : i32
    %c0_i32_0 = arith.constant 0 : i32
    %c0_i32_1 = arith.constant 0 : i32
    return %c0_i32, %c0_i32_0 : i32, i32
  }
  func.func @transform_8(%arg0: i32) -> (i32, i32) {
    %c0_i32 = arith.constant 0 : i32
    %c0_i32_0 = arith.constant 0 : i32
    %c0_i32_1 = arith.constant 0 : i32
    return %c0_i32, %c0_i32_0 : i32, i32
  }
  func.func @transform_9(%arg0: i32) -> (i32, i32) {
    %c0_i32 = arith.constant 0 : i32
    %c0_i32_0 = arith.constant 0 : i32
    return %arg0, %c0_i32 : i32, i32
  }
}

</mosaic_0001>

<llo_original>
// kernel: tpu_custom_call.1
$region0: #{tpu_custom_call.1}
  #allocation0 [shape = 'u32[]', space=smem, size = 0x4, offset = 0x4, fixed_abs, tag = 'smem constant byte address 0x4 - core index']
  #allocation1 [shape = 'u32[144,128]{1,0:T(1,128)}', space=vmem, size = 0x12000, scoped, tag = 'internal scratch']
  %s0 = inlined_call_operand.vmem [shape: f32[8,64], index: 0, kind: input, shape index: {}]
  %s1 = inlined_call_operand.hbm [shape: bf16[64,128], index: 1, kind: input, shape index: {}]
  %s2 = inlined_call_operand.vmem [shape: f32[1,128], index: 2, kind: input, shape index: {}]
  %s3 = inlined_call_operand.vmem [shape: bf16[128,128], index: 3, kind: input, shape index: {}]
  %s4 = inlined_call_operand.hbm [shape: f32[1,128], index: 4, kind: input, shape index: {}]
  %s5 = inlined_call_operand.hbm [shape: bf16[128,128], index: 5, kind: input, shape index: {}]
  %s6 = inlined_call_operand.vmem [shape: f32[1,128], index: 6, kind: input, shape index: {}]
  %s7 = inlined_call_operand.vmem [shape: bf16[128,8], index: 7, kind: input, shape index: {}]
  %s8 = inlined_call_operand.vmem [shape: f32[1,8], index: 8, kind: input, shape index: {}]
  %s9 = inlined_call_operand.hbm [shape: f32[8,8], index: 9, kind: output, shape index: {}]
  %s10 = sld [smem:[#allocation0]]
  $region58: #{tpu_custom_call.1} parent=0
    _
  %s12 = ssub.s32 1, %s10
  %s13 = scalar_select 0, %s12, %s10
  $region1: #{tpu_custom_call.1} parent=0
    #allocation2 [shape = 'u8[16384]{0}', space=vmem, size = 0x4000, scoped, tag = 'input window, operand 1, single buffered']
    #allocation3 [shape = 's32[1]{0}', space=sflag, size = 0x4, scoped, tag = 'scoped memory for tpu_custom_call.1']
    #allocation4 [shape = 's32[1]{0}', space=sflag, size = 0x4, scoped, tag = 'scoped memory for tpu_custom_call.1']
    #allocation5 [shape = 'u8[512]{0}', space=vmem, size = 0x400, scoped, tag = 'input window, operand 4, single buffered']
    #allocation6 [shape = 's32[1]{0}', space=sflag, size = 0x4, scoped, tag = 'scoped memory for tpu_custom_call.1']
    #allocation7 [shape = 'u8[32768]{0}', space=vmem, size = 0x8000, scoped, tag = 'input window, operand 5, single buffered']
    #allocation8 [shape = 'u8[4096]{0}', space=vmem, size = 0x1000, scoped, tag = 'output window, operand 0, single buffered']
    %14 = vsyncpa [#allocation3], 0
    %15 = vsyncpa [#allocation6], 0
    %16 = vsyncpa [#allocation4], 0
    // Predicated region
    $region2: #{tpu_custom_call.1} parent=1 // pred_check
      _
    $region3: #{tpu_custom_call.1} parent=1 // pred_check_branch
      %18 = sbr.rel (0) target = $region5
    $region4: #{tpu_custom_call.1} parent=1 // pred_region
      _
    $region5: #{tpu_custom_call.1} parent=1 // pred_fallthru
      _
    // Predicated region
    $region6: #{tpu_custom_call.1} parent=1 // pred_check
      _
    $region7: #{tpu_custom_call.1} parent=1 // pred_check_branch
      %20 = sbr.rel (0) target = $region9
    $region8: #{tpu_custom_call.1} parent=1 // pred_region
      %s22 = ssub.s32 512, 512
      %23 = vsyncadd [#allocation3], %s22
      %s24 = sshll.u32 [#allocation2], 4
      %s25 = int_to_ptr.vmem [resolvable:$true] %s24
      %30 = dma.hbm_to_vmem [thread:$0]  %s1, 512, %s25, [#allocation3], 64, 64, 4
    $region9: #{tpu_custom_call.1} parent=1 // pred_fallthru
      _
    // Predicated region
    $region10: #{tpu_custom_call.1} parent=1 // pred_check
      _
    $region11: #{tpu_custom_call.1} parent=1 // pred_check_branch
      %32 = sbr.rel (0) target = $region13
    $region12: #{tpu_custom_call.1} parent=1 // pred_region
      _
    $region13: #{tpu_custom_call.1} parent=1 // pred_fallthru
      _
    // Predicated region
    $region14: #{tpu_custom_call.1} parent=1 // pred_check
      _
    $region15: #{tpu_custom_call.1} parent=1 // pred_check_branch
      %34 = sbr.rel (0) target = $region17
    $region16: #{tpu_custom_call.1} parent=1 // pred_region
      _
    $region17: #{tpu_custom_call.1} parent=1 // pred_fallthru
      _
    // Predicated region
    $region18: #{tpu_custom_call.1} parent=1 // pred_check
      _
    $region19: #{tpu_custom_call.1} parent=1 // pred_check_branch
      %36 = sbr.rel (0) target = $region21
    $region20: #{tpu_custom_call.1} parent=1 // pred_region
      %s38 = ssub.s32 16, 16
      %39 = vsyncadd [#allocation6], %s38
      %s41 = sshll.u32 [#allocation5], 4
      %s42 = int_to_ptr.vmem [resolvable:$true] %s41
      %44 = dma.hbm_to_vmem [thread:$0]  %s4, 16, %s42, [#allocation6]
    $region21: #{tpu_custom_call.1} parent=1 // pred_fallthru
      _
    // Predicated region
    $region22: #{tpu_custom_call.1} parent=1 // pred_check
      _
    $region23: #{tpu_custom_call.1} parent=1 // pred_check_branch
      %46 = sbr.rel (0) target = $region25
    $region24: #{tpu_custom_call.1} parent=1 // pred_region
      %s48 = ssub.s32 1024, 1024
      %49 = vsyncadd [#allocation6], %s48
      %s50 = sshll.u32 [#allocation7], 4
      %s51 = int_to_ptr.vmem [resolvable:$true] %s50
      %56 = dma.hbm_to_vmem [thread:$0]  %s5, 1024, %s51, [#allocation6], 64, 64, 4
    $region25: #{tpu_custom_call.1} parent=1 // pred_fallthru
      _
    // Predicated region
    $region26: #{tpu_custom_call.1} parent=1 // pred_check
      _
    $region27: #{tpu_custom_call.1} parent=1 // pred_check_branch
      %58 = sbr.rel (0) target = $region29
    $region28: #{tpu_custom_call.1} parent=1 // pred_region
      _
    $region29: #{tpu_custom_call.1} parent=1 // pred_fallthru
      _
    // Predicated region
    $region30: #{tpu_custom_call.1} parent=1 // pred_check
      _
    $region31: #{tpu_custom_call.1} parent=1 // pred_check_branch
      %60 = sbr.rel (0) target = $region33
    $region32: #{tpu_custom_call.1} parent=1 // pred_region
      _
    $region33: #{tpu_custom_call.1} parent=1 // pred_fallthru
      _
    // Predicated region
    $region34: #{tpu_custom_call.1} parent=1 // pred_check
      _
    $region35: #{tpu_custom_call.1} parent=1 // pred_check_branch
      %62 = sbr.rel (0) target = $region37
    $region36: #{tpu_custom_call.1} parent=1 // pred_region
      _
    $region37: #{tpu_custom_call.1} parent=1 // pred_fallthru
      _
    // Predicated region
    $region38: #{tpu_custom_call.1} parent=1 // pred_check
      _
    $region39: #{tpu_custom_call.1} parent=1 // pred_check_branch
      %64 = sbr.rel (0) target = $region41
    $region40: #{tpu_custom_call.1} parent=1 // pred_region
      %65 = dma.done [#allocation3], 512
    $region41: #{tpu_custom_call.1} parent=1 // pred_fallthru
      _
    // Predicated region
    $region42: #{tpu_custom_call.1} parent=1 // pred_check
      _
    $region43: #{tpu_custom_call.1} parent=1 // pred_check_branch
      %67 = sbr.rel (0) target = $region45
    $region44: #{tpu_custom_call.1} parent=1 // pred_region
      %68 = dma.done [#allocation6], 16
    $region45: #{tpu_custom_call.1} parent=1 // pred_fallthru
      _
    // Predicated region
    $region46: #{tpu_custom_call.1} parent=1 // pred_check
      _
    $region47: #{tpu_custom_call.1} parent=1 // pred_check_branch
      %70 = sbr.rel (0) target = $region49
    $region48: #{tpu_custom_call.1} parent=1 // pred_region
      %71 = dma.done [#allocation6], 1024
    $region49: #{tpu_custom_call.1} parent=1 // pred_fallthru
      _
    %v73 = vld [vmem:[%s0] sm:$0xff]
    %v74 = vpack.c.bf16 %v73, %v73
    %v75 = vld [vmem:[#allocation2] sm:$0xf]
    %v76 = vld [vmem:[#allocation2 + $0x4] sm:$0xf]
    %v77 = vld [vmem:[#allocation2 + $0x8] sm:$0xf]
    %v78 = vld [vmem:[#allocation2 + $0xc] sm:$0xf]
    %v79 = vld [vmem:[#allocation2 + $0x10] sm:$0xf]
    %v80 = vld [vmem:[#allocation2 + $0x14] sm:$0xf]
    %v81 = vld [vmem:[#allocation2 + $0x18] sm:$0xf]
    %v82 = vld [vmem:[#allocation2 + $0x1c] sm:$0xf]
    %v83 = vld [vmem:[%s2] sm:$0x1]
    %v85 = vlaneseq
    %v86 = vshrl.u32 %v85, 7
    %v87 = vsub.s32 0, %v86
    %v88 = vrot.slane %v83, %v87
    %v98 = vunpack.c.l.b16 %v75
    %v99 = vunpack.c.l.b16 %v76
    %v100 = vunpack.c.l.b16 %v77
    %v101 = vunpack.c.l.b16 %v78
    %v102 = vunpack.c.l.b16 %v79
    %v103 = vunpack.c.l.b16 %v80
    %v104 = vunpack.c.l.b16 %v81
    %v105 = vunpack.c.l.b16 %v82
    %v106 = vpack.c.b16 %v99, %v98
    %v107 = vpack.c.b16 %v101, %v100
    %v108 = vpack.c.b16 %v103, %v102
    %v109 = vpack.c.b16 %v105, %v104
    %vm114 = vcmask 523264
    %v116 = vsel %vm114, %v74, 0
    %118 = vmatprep.subr.bf16.mxu0 0
    %119 = vmatpush1.bf16.msra.mxu0 0
    %120 = vmatprep.subr.bf16.mxu0 0
    %121 = vmatpush1.bf16.msra.mxu0 0
    %122 = vmatprep.subr.bf16.mxu0 0
    %123 = vmatpush1.bf16.msra.mxu0 0
    %124 = vmatprep.subr.bf16.mxu0 0
    %125 = vmatpush1.bf16.msra.mxu0 0
    %126 = vmatprep.subr.bf16.mxu0 0
    %127 = vmatpush1.bf16.msra.mxu0 %v109
    %128 = vmatprep.subr.bf16.mxu0 0
    %129 = vmatpush1.bf16.msra.mxu0 %v108
    %130 = vmatprep.subr.bf16.mxu0 0
    %131 = vmatpush1.bf16.msra.mxu0 %v107
    %132 = vmatprep.subr.bf16.mxu0 0
    %133 = vmatpush1.bf16.msra.mxu0 %v106
    %134 = vmatprep.subr.bf16.mxu0 0
    %135 = vmatpush2.bf16.msra.mxu0 0
    %136 = vmatprep.subr.bf16.mxu0 0
    %137 = vmatpush2.bf16.msra.mxu0 0
    %138 = vmatprep.subr.bf16.mxu0 0
    %139 = vmatpush2.bf16.msra.mxu0 0
    %140 = vmatprep.subr.bf16.mxu0 0
    %141 = vmatpush2.bf16.msra.mxu0 0
    %142 = vmatprep.subr.bf16.mxu0 0
    %143 = vmatpush2.bf16.msra.mxu0 0
    %144 = vmatprep.subr.bf16.mxu0 0
    %145 = vmatpush2.bf16.msra.mxu0 0
    %146 = vmatprep.subr.bf16.mxu0 0
    %147 = vmatpush2.bf16.msra.mxu0 0
    %148 = vmatprep.subr.bf16.mxu0 0
    %149 = vmatpush2.bf16.msra.mxu0 0
    %150 = vmatprep.mubr.bf16.mxu0 0
    %151 = vmatmul.mubr.bf16.gmra.mxu0 %v116
    %v152 = vpop.f32.mrf.mxu0
    %v153 = vadd.f32 %v88, %v152
    %v154 = vpop.f32.mrf.mxu0
    %v155 = vpop.f32.mrf.mxu0
    %v156 = vpop.f32.mrf.mxu0
    %157 = vdwg.mxu0
    %v158 = vmax.f32 %v153, 0.0
    %v159 = vpack.c.bf16 %v158, %v158
    %v160 = vld [vmem:[%s3] sm:$0xf]
    %v161 = vld [vmem:[%s3 + $0x4] sm:$0xf]
    %v162 = vld [vmem:[%s3 + $0x8] sm:$0xf]
    %v163 = vld [vmem:[%s3 + $0xc] sm:$0xf]
    %v164 = vld [vmem:[%s3 + $0x10] sm:$0xf]
    %v165 = vld [vmem:[%s3 + $0x14] sm:$0xf]
    %v166 = vld [vmem:[%s3 + $0x18] sm:$0xf]
    %v167 = vld [vmem:[%s3 + $0x1c] sm:$0xf]
    %v168 = vld [vmem:[%s3 + $0x20] sm:$0xf]
    %v169 = vld [vmem:[%s3 + $0x24] sm:$0xf]
    %v170 = vld [vmem:[%s3 + $0x28] sm:$0xf]
    %v171 = vld [vmem:[%s3 + $0x2c] sm:$0xf]
    %v172 = vld [vmem:[%s3 + $0x30] sm:$0xf]
    %v173 = vld [vmem:[%s3 + $0x34] sm:$0xf]
    %v174 = vld [vmem:[%s3 + $0x38] sm:$0xf]
    %v175 = vld [vmem:[%s3 + $0x3c] sm:$0xf]
    %v176 = vld [vmem:[#allocation5] sm:$0x1]
    %v178 = vlaneseq
    %v179 = vshrl.u32 %v178, 7
    %v180 = vsub.s32 0, %v179
    %v181 = vrot.slane %v176, %v180
    %v199 = vunpack.c.l.b16 %v160
    %v200 = vunpack.c.l.b16 %v161
    %v201 = vunpack.c.l.b16 %v162
    %v202 = vunpack.c.l.b16 %v163
    %v203 = vunpack.c.l.b16 %v164
    %v204 = vunpack.c.l.b16 %v165
    %v205 = vunpack.c.l.b16 %v166
    %v206 = vunpack.c.l.b16 %v167
    %v207 = vunpack.c.l.b16 %v168
    %v208 = vunpack.c.l.b16 %v169
    %v209 = vunpack.c.l.b16 %v170
    %v210 = vunpack.c.l.b16 %v171
    %v211 = vunpack.c.l.b16 %v172
    %v212 = vunpack.c.l.b16 %v173
    %v213 = vunpack.c.l.b16 %v174
    %v214 = vunpack.c.l.b16 %v175
    %v215 = vpack.c.b16 %v200, %v199
    %v216 = vpack.c.b16 %v202, %v201
    %v217 = vpack.c.b16 %v204, %v203
    %v218 = vpack.c.b16 %v206, %v205
    %v219 = vpack.c.b16 %v208, %v207
    %v220 = vpack.c.b16 %v210, %v209
    %v221 = vpack.c.b16 %v212, %v211
    %v222 = vpack.c.b16 %v214, %v213
    %231 = vmatprep.subr.bf16.mxu0 0
    %232 = vmatpush1.bf16.msra.mxu0 %v222
    %233 = vmatprep.subr.bf16.mxu0 0
    %234 = vmatpush1.bf16.msra.mxu0 %v221
    %235 = vmatprep.subr.bf16.mxu0 0
    %236 = vmatpush1.bf16.msra.mxu0 %v220
    %237 = vmatprep.subr.bf16.mxu0 0
    %238 = vmatpush1.bf16.msra.mxu0 %v219
    %239 = vmatprep.subr.bf16.mxu0 0
    %240 = vmatpush1.bf16.msra.mxu0 %v218
    %241 = vmatprep.subr.bf16.mxu0 0
    %242 = vmatpush1.bf16.msra.mxu0 %v217
    %243 = vmatprep.subr.bf16.mxu0 0
    %244 = vmatpush1.bf16.msra.mxu0 %v216
    %245 = vmatprep.subr.bf16.mxu0 0
    %246 = vmatpush1.bf16.msra.mxu0 %v215
    %247 = vmatprep.subr.bf16.mxu0 0
    %248 = vmatpush2.bf16.msra.mxu0 0
    %249 = vmatprep.subr.bf16.mxu0 0
    %250 = vmatpush2.bf16.msra.mxu0 0
    %251 = vmatprep.subr.bf16.mxu0 0
    %252 = vmatpush2.bf16.msra.mxu0 0
    %253 = vmatprep.subr.bf16.mxu0 0
    %254 = vmatpush2.bf16.msra.mxu0 0
    %255 = vmatprep.subr.bf16.mxu0 0
    %256 = vmatpush2.bf16.msra.mxu0 0
    %257 = vmatprep.subr.bf16.mxu0 0
    %258 = vmatpush2.bf16.msra.mxu0 0
    %259 = vmatprep.subr.bf16.mxu0 0
    %260 = vmatpush2.bf16.msra.mxu0 0
    %261 = vmatprep.subr.bf16.mxu0 0
    %262 = vmatpush2.bf16.msra.mxu0 0
    %263 = vmatprep.mubr.bf16.mxu0 0
    %264 = vmatmul.mubr.bf16.gmra.mxu0 %v159
    %v265 = vpop.f32.mrf.mxu0
    %v266 = vadd.f32 %v181, %v265
    %v267 = vpop.f32.mrf.mxu0
    %v268 = vpop.f32.mrf.mxu0
    %v269 = vpop.f32.mrf.mxu0
    %270 = vdwg.mxu0
    %v271 = vmax.f32 %v266, 0.0
    %v272 = vpack.c.bf16 %v271, %v271
    %v273 = vld [vmem:[#allocation7] sm:$0xf]
    %v274 = vld [vmem:[#allocation7 + $0x4] sm:$0xf]
    %v275 = vld [vmem:[#allocation7 + $0x8] sm:$0xf]
    %v276 = vld [vmem:[#allocation7 + $0xc] sm:$0xf]
    %v277 = vld [vmem:[#allocation7 + $0x10] sm:$0xf]
    %v278 = vld [vmem:[#allocation7 + $0x14] sm:$0xf]
    %v279 = vld [vmem:[#allocation7 + $0x18] sm:$0xf]
    %v280 = vld [vmem:[#allocation7 + $0x1c] sm:$0xf]
    %v281 = vld [vmem:[#allocation7 + $0x20] sm:$0xf]
    %v282 = vld [vmem:[#allocation7 + $0x24] sm:$0xf]
    %v283 = vld [vmem:[#allocation7 + $0x28] sm:$0xf]
    %v284 = vld [vmem:[#allocation7 + $0x2c] sm:$0xf]
    %v285 = vld [vmem:[#allocation7 + $0x30] sm:$0xf]
    %v286 = vld [vmem:[#allocation7 + $0x34] sm:$0xf]
    %v287 = vld [vmem:[#allocation7 + $0x38] sm:$0xf]
    %v288 = vld [vmem:[#allocation7 + $0x3c] sm:$0xf]
    %v289 = vld [vmem:[%s6] sm:$0x1]
    %v291 = vlaneseq
    %v292 = vshrl.u32 %v291, 7
    %v293 = vsub.s32 0, %v292
    %v294 = vrot.slane %v289, %v293
    %v312 = vunpack.c.l.b16 %v273
    %v313 = vunpack.c.l.b16 %v274
    %v314 = vunpack.c.l.b16 %v275
    %v315 = vunpack.c.l.b16 %v276
    %v316 = vunpack.c.l.b16 %v277
    %v317 = vunpack.c.l.b16 %v278
    %v318 = vunpack.c.l.b16 %v279
    %v319 = vunpack.c.l.b16 %v280
    %v320 = vunpack.c.l.b16 %v281
    %v321 = vunpack.c.l.b16 %v282
    %v322 = vunpack.c.l.b16 %v283
    %v323 = vunpack.c.l.b16 %v284
    %v324 = vunpack.c.l.b16 %v285
    %v325 = vunpack.c.l.b16 %v286
    %v326 = vunpack.c.l.b16 %v287
    %v327 = vunpack.c.l.b16 %v288
    %v328 = vpack.c.b16 %v313, %v312
    %v329 = vpack.c.b16 %v315, %v314
    %v330 = vpack.c.b16 %v317, %v316
    %v331 = vpack.c.b16 %v319, %v318
    %v332 = vpack.c.b16 %v321, %v320
    %v333 = vpack.c.b16 %v323, %v322
    %v334 = vpack.c.b16 %v325, %v324
    %v335 = vpack.c.b16 %v327, %v326
    %344 = vmatprep.subr.bf16.mxu0 0
    %345 = vmatpush1.bf16.msra.mxu0 %v335
    %346 = vmatprep.subr.bf16.mxu0 0
    %347 = vmatpush1.bf16.msra.mxu0 %v334
    %348 = vmatprep.subr.bf16.mxu0 0
    %349 = vmatpush1.bf16.msra.mxu0 %v333
    %350 = vmatprep.subr.bf16.mxu0 0
    %351 = vmatpush1.bf16.msra.mxu0 %v332
    %352 = vmatprep.subr.bf16.mxu0 0
    %353 = vmatpush1.bf16.msra.mxu0 %v331
    %354 = vmatprep.subr.bf16.mxu0 0
    %355 = vmatpush1.bf16.msra.mxu0 %v330
    %356 = vmatprep.subr.bf16.mxu0 0
    %357 = vmatpush1.bf16.msra.mxu0 %v329
    %358 = vmatprep.subr.bf16.mxu0 0
    %359 = vmatpush1.bf16.msra.mxu0 %v328
    %360 = vmatprep.subr.bf16.mxu0 0
    %361 = vmatpush2.bf16.msra.mxu0 0
    %362 = vmatprep.subr.bf16.mxu0 0
    %363 = vmatpush2.bf16.msra.mxu0 0
    %364 = vmatprep.subr.bf16.mxu0 0
    %365 = vmatpush2.bf16.msra.mxu0 0
    %366 = vmatprep.subr.bf16.mxu0 0
    %367 = vmatpush2.bf16.msra.mxu0 0
    %368 = vmatprep.subr.bf16.mxu0 0
    %369 = vmatpush2.bf16.msra.mxu0 0
    %370 = vmatprep.subr.bf16.mxu0 0
    %371 = vmatpush2.bf16.msra.mxu0 0
    %372 = vmatprep.subr.bf16.mxu0 0
    %373 = vmatpush2.bf16.msra.mxu0 0
    %374 = vmatprep.subr.bf16.mxu0 0
    %375 = vmatpush2.bf16.msra.mxu0 0
    %376 = vmatprep.mubr.bf16.mxu0 0
    %377 = vmatmul.mubr.bf16.gmra.mxu0 %v272
    %v378 = vpop.f32.mrf.mxu0
    %v379 = vadd.f32 %v294, %v378
    %v380 = vpop.f32.mrf.mxu0
    %v381 = vpop.f32.mrf.mxu0
    %v382 = vpop.f32.mrf.mxu0
    %383 = vdwg.mxu0
    %v384 = vmax.f32 %v379, 0.0
    %v385 = vpack.c.bf16 %v384, %v384
    %v386 = vld [vmem:[%s7] sm:$0xf]
    %v387 = vld [vmem:[%s7 + $0x4] sm:$0xf]
    %v388 = vld [vmem:[%s7 + $0x8] sm:$0xf]
    %v389 = vld [vmem:[%s7 + $0xc] sm:$0xf]
    %v390 = vld [vmem:[%s7 + $0x10] sm:$0xf]
    %v391 = vld [vmem:[%s7 + $0x14] sm:$0xf]
    %v392 = vld [vmem:[%s7 + $0x18] sm:$0xf]
    %v393 = vld [vmem:[%s7 + $0x1c] sm:$0xf]
    %v394 = vld [vmem:[%s7 + $0x20] sm:$0xf]
    %v395 = vld [vmem:[%s7 + $0x24] sm:$0xf]
    %v396 = vld [vmem:[%s7 + $0x28] sm:$0xf]
    %v397 = vld [vmem:[%s7 + $0x2c] sm:$0xf]
    %v398 = vld [vmem:[%s7 + $0x30] sm:$0xf]
    %v399 = vld [vmem:[%s7 + $0x34] sm:$0xf]
    %v400 = vld [vmem:[%s7 + $0x38] sm:$0xf]
    %v401 = vld [vmem:[%s7 + $0x3c] sm:$0xf]
    %v402 = vld [vmem:[%s8] sm:$0x1]
    %v404 = vlaneseq
    %v405 = vshrl.u32 %v404, 7
    %v406 = vsub.s32 0, %v405
    %v407 = vrot.slane %v402, %v406
    %v425 = vunpack.c.l.b16 %v386
    %v426 = vunpack.c.l.b16 %v387
    %v427 = vunpack.c.l.b16 %v388
    %v428 = vunpack.c.l.b16 %v389
    %v429 = vunpack.c.l.b16 %v390
    %v430 = vunpack.c.l.b16 %v391
    %v431 = vunpack.c.l.b16 %v392
    %v432 = vunpack.c.l.b16 %v393
    %v433 = vunpack.c.l.b16 %v394
    %v434 = vunpack.c.l.b16 %v395
    %v435 = vunpack.c.l.b16 %v396
    %v436 = vunpack.c.l.b16 %v397
    %v437 = vunpack.c.l.b16 %v398
    %v438 = vunpack.c.l.b16 %v399
    %v439 = vunpack.c.l.b16 %v400
    %v440 = vunpack.c.l.b16 %v401
    %v441 = vpack.c.b16 %v426, %v425
    %v442 = vpack.c.b16 %v428, %v427
    %v443 = vpack.c.b16 %v430, %v429
    %v444 = vpack.c.b16 %v432, %v431
    %v445 = vpack.c.b16 %v434, %v433
    %v446 = vpack.c.b16 %v436, %v435
    %v447 = vpack.c.b16 %v438, %v437
    %v448 = vpack.c.b16 %v440, %v439
    %457 = vmatprep.subr.bf16.mxu0 0
    %458 = vmatpush1.bf16.msra.mxu0 %v448
    %459 = vmatprep.subr.bf16.mxu0 0
    %460 = vmatpush1.bf16.msra.mxu0 %v447
    %461 = vmatprep.subr.bf16.mxu0 0
    %462 = vmatpush1.bf16.msra.mxu0 %v446
    %463 = vmatprep.subr.bf16.mxu0 0
    %464 = vmatpush1.bf16.msra.mxu0 %v445
    %465 = vmatprep.subr.bf16.mxu0 0
    %466 = vmatpush1.bf16.msra.mxu0 %v444
    %467 = vmatprep.subr.bf16.mxu0 0
    %468 = vmatpush1.bf16.msra.mxu0 %v443
    %469 = vmatprep.subr.bf16.mxu0 0
    %470 = vmatpush1.bf16.msra.mxu0 %v442
    %471 = vmatprep.subr.bf16.mxu0 0
    %472 = vmatpush1.bf16.msra.mxu0 %v441
    %473 = vmatprep.subr.bf16.mxu0 0
    %474 = vmatpush2.bf16.msra.mxu0 0
    %475 = vmatprep.subr.bf16.mxu0 0
    %476 = vmatpush2.bf16.msra.mxu0 0
    %477 = vmatprep.subr.bf16.mxu0 0
    %478 = vmatpush2.bf16.msra.mxu0 0
    %479 = vmatprep.subr.bf16.mxu0 0
    %480 = vmatpush2.bf16.msra.mxu0 0
    %481 = vmatprep.subr.bf16.mxu0 0
    %482 = vmatpush2.bf16.msra.mxu0 0
    %483 = vmatprep.subr.bf16.mxu0 0
    %484 = vmatpush2.bf16.msra.mxu0 0
    %485 = vmatprep.subr.bf16.mxu0 0
    %486 = vmatpush2.bf16.msra.mxu0 0
    %487 = vmatprep.subr.bf16.mxu0 0
    %488 = vmatpush2.bf16.msra.mxu0 0
    %489 = vmatprep.mubr.bf16.mxu0 0
    %490 = vmatmul.mubr.bf16.gmra.mxu0 %v385
    %v491 = vpop.f32.mrf.mxu0
    %v492 = vadd.f32 %v407, %v491
    %v493 = vpop.f32.mrf.mxu0
    %v494 = vpop.f32.mrf.mxu0
    %v495 = vpop.f32.mrf.mxu0
    %496 = vdwg.mxu0
    %vm497 = vcmask 64512
    %498 = vst.msk [vmem:[#allocation8] sm:$0xff] %vm497, %v492
    // Predicated region
    $region50: #{tpu_custom_call.1} parent=1 // pred_check
      _
    $region51: #{tpu_custom_call.1} parent=1 // pred_check_branch
      %500 = sbr.rel (0) target = $region53
    $region52: #{tpu_custom_call.1} parent=1 // pred_region
      %s502 = ssub.s32 128, 128
      %503 = vsyncadd [#allocation4], %s502
      %s505 = sshll.u32 [#allocation8], 4
      %s506 = int_to_ptr.vmem [resolvable:$true] %s505
      %508 = dma.vmem_to_hbm [thread:$0]  %s506, 128, %s9, [#allocation4]
    $region53: #{tpu_custom_call.1} parent=1 // pred_fallthru
      _
    // Predicated region
    $region54: #{tpu_custom_call.1} parent=1 // pred_check
      _
    $region55: #{tpu_custom_call.1} parent=1 // pred_check_branch
      %510 = sbr.rel (0) target = $region57
    $region56: #{tpu_custom_call.1} parent=1 // pred_region
      %511 = dma.done [#allocation4], 128
    $region57: #{tpu_custom_call.1} parent=1 // pred_fallthru
      _
    %512 = vsyncpa [#allocation3], 1
    %513 = vsyncpa [#allocation6], 1
    %514 = vsyncpa [#allocation4], 1

</llo_original>
